<compile_context>
chip_gen: v6e
topology: v6e:2x2x1
jax: 0.10.0
libtpu: 0.0.40
codegen_flags: <defaults>
</compile_context>

<pallas_src>
import jax
import jax.numpy as jnp
from jax.experimental import pallas as pl
from jax.experimental.pallas import tpu as pltpu


# ----------------------------------------------------------------------------
# Fused kernel: chain of  x <- tanh(x @ W_l + b_l)  for l = 0 .. L-1
# ----------------------------------------------------------------------------
def _make_fused_mlp_kernel(num_layers):
    def kernel(*refs):
        # refs = (x_ref, w0_ref, b0_ref, w1_ref, b1_ref, ..., o_ref)
        x_ref = refs[0]
        o_ref = refs[-1]
        acc = x_ref[...].astype(jnp.float32)
        for l in range(num_layers):
            w = refs[1 + 2 * l][...]          # (Din_l, Dout_l)
            b = refs[2 + 2 * l][...]          # (1, Dout_l) -> broadcasts over batch
            acc = jnp.tanh(
                jnp.dot(acc, w, preferred_element_type=jnp.float32) + b
            )
        o_ref[...] = acc.astype(o_ref.dtype)

    return kernel


def _pick_batch_tile(batch, max_tile=512):
    """Largest batch tile <= max_tile that divides batch (multiple of 8 when tiling)."""
    if batch <= max_tile:
        return batch
    for tb in range(max_tile, 7, -8):
        if batch % tb == 0:
            return tb
    return batch


def fused_mlp_forward(x, params, *, max_batch_tile=512):
    """y = tanh(...tanh(tanh(x @ W0 + b0) @ W1 + b1)... ) in ONE pallas_call.

    params: list of (w, b) with w shaped (Din, Dout) and b shaped (1, Dout).
    Weights/biases are full-array VMEM blocks resident across the batch grid;
    x / out are tiled over the batch dimension.
    """
    batch, d_in = x.shape
    num_layers = len(params)
    d_out = params[-1][0].shape[1]

    tb = _pick_batch_tile(batch, max_batch_tile)
    grid = (batch // tb,)

    in_specs = [pl.BlockSpec((tb, d_in), lambda i: (i, 0))]
    flat_inputs = [x]
    for (w, b) in params:
        din_l, dout_l = w.shape
        in_specs.append(pl.BlockSpec((din_l, dout_l), lambda i: (0, 0)))
        in_specs.append(pl.BlockSpec((1, dout_l), lambda i: (0, 0)))
        flat_inputs.append(w)
        flat_inputs.append(b)

    # Advisory cost estimate so XLA does not serialize unrelated work around
    # the custom call.
    flops = 2 * batch * sum(int(w.shape[0]) * int(w.shape[1]) for w, _ in params)
    transcendentals = batch * sum(int(w.shape[1]) for w, _ in params)
    bytes_accessed = (
        x.size * x.dtype.itemsize
        + batch * d_out * x.dtype.itemsize
        + sum(w.size * w.dtype.itemsize + b.size * b.dtype.itemsize for w, b in params)
    )

    return pl.pallas_call(
        _make_fused_mlp_kernel(num_layers),
        out_shape=jax.ShapeDtypeStruct((batch, d_out), x.dtype),
        grid=grid,
        in_specs=in_specs,
        out_specs=pl.BlockSpec((tb, d_out), lambda i: (i, 0)),
        compiler_params=pltpu.CompilerParams(
            dimension_semantics=("parallel",)
        ),
        cost_estimate=pl.CostEstimate(
            flops=flops,
            transcendentals=transcendentals,
            bytes_accessed=bytes_accessed,
        ),
    )(*flat_inputs)


# ----------------------------------------------------------------------------
# Model wrapper mirroring the PyTorch AutoEncoder forward semantics
# ----------------------------------------------------------------------------
class AutoEncoderPallas:
    """Mirrors refine/auto_encoder.py::AutoEncoder (Linear + Tanh stacks)."""

    def __init__(self, layers_sizes, key, dtype=jnp.float32):
        self.layers_sizes = list(layers_sizes)
        self.dtype = dtype
        enc_params = []
        dec_params = []
        n = len(layers_sizes)
        keys = jax.random.split(key, 2 * (n - 1))
        k = 0
        # Encoder: Linear(layers[i] -> layers[i+1])
        for i in range(n - 1):
            din, dout = layers_sizes[i], layers_sizes[i + 1]
            kw, kb = jax.random.split(keys[k]); k += 1
            bound = 1.0 / float(jnp.sqrt(din))
            # (in, out) layout == transpose of PyTorch's (out, in) weight.
            w = jax.random.uniform(kw, (din, dout), dtype, -bound, bound)
            b = jax.random.uniform(kb, (1, dout), dtype, -bound, bound)  # 2-D once, at init
            enc_params.append((w, b))
        # Decoder: Linear(layers[i] -> layers[i-1]) for i = n-1 .. 1
        for i in range(n - 1, 0, -1):
            din, dout = layers_sizes[i], layers_sizes[i - 1]
            kw, kb = jax.random.split(keys[k]); k += 1
            bound = 1.0 / float(jnp.sqrt(din))
            w = jax.random.uniform(kw, (din, dout), dtype, -bound, bound)
            b = jax.random.uniform(kb, (1, dout), dtype, -bound, bound)
            dec_params.append((w, b))
        self.enc_params = enc_params
        self.dec_params = dec_params

    def encode(self, x):
        return fused_mlp_forward(x, self.enc_params)

    def decode(self, x):
        return fused_mlp_forward(x, self.dec_params)

    def __call__(self, x):
        # Fully fused: encoder + decoder in one kernel launch.
        return fused_mlp_forward(x, self.enc_params + self.dec_params)


def _reference_forward(model, x):
    """Pure-JAX reference for a correctness sanity check."""
    for w, b in model.enc_params + model.dec_params:
        x = jnp.tanh(x @ w + b)
    return x


if __name__ == "__main__":
    key = jax.random.PRNGKey(0)
    k_model, k_x, k_x2 = jax.random.split(key, 3)

    layers_sizes = [32, 16, 8]   # input dim 32, bottleneck 8
    batch = 8

    model = AutoEncoderPallas(layers_sizes, k_model)
    x = jax.random.normal(k_x, (batch, layers_sizes[0]), jnp.float32)

    fwd = jax.jit(model.__call__)
    out = jax.block_until_ready(fwd(x))

    ref = _reference_forward(model, x)
    assert out.shape == (batch, layers_sizes[0])
    assert jnp.allclose(out, ref, atol=1e-5, rtol=1e-5)

    # Also exercise the batch-tiled grid path (grid > 1, weights resident).
    x2 = jax.random.normal(k_x2, (64, layers_sizes[0]), jnp.float32)
    out2 = jax.block_until_ready(
        fused_mlp_forward(x2, model.enc_params + model.dec_params, max_batch_tile=16)
    )
    ref2 = _reference_forward(model, x2)
    assert out2.shape == (64, layers_sizes[0])
    assert jnp.allclose(out2, ref2, atol=1e-5, rtol=1e-5)

    print("KERNEL_OK")
</pallas_src>

<mosaic_0001>
module attributes {stable_mosaic.version = 11 : i64} {
  func.func @kernel(%arg0: i32, %arg1: memref<8x32xf32, #tpu.memory_space<vmem>>, %arg2: memref<32x16xf32, #tpu.memory_space<vmem>>, %arg3: memref<1x16xf32, #tpu.memory_space<vmem>>, %arg4: memref<16x8xf32, #tpu.memory_space<vmem>>, %arg5: memref<1x8xf32, #tpu.memory_space<vmem>>, %arg6: memref<8x16xf32, #tpu.memory_space<vmem>>, %arg7: memref<1x16xf32, #tpu.memory_space<vmem>>, %arg8: memref<16x32xf32, #tpu.memory_space<vmem>>, %arg9: memref<1x32xf32, #tpu.memory_space<vmem>>, %arg10: memref<8x32xf32, #tpu.memory_space<vmem>>) attributes {dimension_semantics = [#tpu.dimension_semantics<parallel>], iteration_bounds = array<i64: 1>, scalar_prefetch = 0 : i64, scratch_operands = 0 : i64, tpu.core_type = #tpu.core_type<tc>, window_params = [{transform_indices = @transform_0, window_bounds = array<i64: 8, 32>}, {pipeline_mode = #tpu.pipeline_mode<synchronous>, transform_indices = @transform_1, window_bounds = array<i64: 32, 16>}, {pipeline_mode = #tpu.pipeline_mode<synchronous>, transform_indices = @transform_2, window_bounds = array<i64: 1, 16>}, {pipeline_mode = #tpu.pipeline_mode<synchronous>, transform_indices = @transform_3, window_bounds = array<i64: 16, 8>}, {pipeline_mode = #tpu.pipeline_mode<synchronous>, transform_indices = @transform_4, window_bounds = array<i64: 1, 8>}, {pipeline_mode = #tpu.pipeline_mode<synchronous>, transform_indices = @transform_5, window_bounds = array<i64: 8, 16>}, {pipeline_mode = #tpu.pipeline_mode<synchronous>, transform_indices = @transform_6, window_bounds = array<i64: 1, 16>}, {pipeline_mode = #tpu.pipeline_mode<synchronous>, transform_indices = @transform_7, window_bounds = array<i64: 16, 32>}, {pipeline_mode = #tpu.pipeline_mode<synchronous>, transform_indices = @transform_8, window_bounds = array<i64: 1, 32>}, {transform_indices = @transform_9, window_bounds = array<i64: 8, 32>}]} {
    %c0 = arith.constant 0 : index
    %c0_0 = arith.constant 0 : index
    %0 = vector.load %arg1[%c0, %c0_0] : memref<8x32xf32, #tpu.memory_space<vmem>>, vector<8x32xf32>
    %c0_1 = arith.constant 0 : index
    %c0_2 = arith.constant 0 : index
    %1 = vector.load %arg2[%c0_1, %c0_2] : memref<32x16xf32, #tpu.memory_space<vmem>>, vector<32x16xf32>
    %c0_3 = arith.constant 0 : index
    %c0_4 = arith.constant 0 : index
    %2 = vector.load %arg3[%c0_3, %c0_4] : memref<1x16xf32, #tpu.memory_space<vmem>>, vector<1x16xf32>
    %cst = arith.constant dense<0.000000e+00> : vector<8x16xf32>
    %3 = tpu.matmul %0, %1, %cst {dimension_numbers = #tpu.dot_dimension_numbers<[1], [0], [0], [1], [0, 0, 1, 1], [], []>} : vector<8x32xf32>, vector<32x16xf32>, vector<8x16xf32> -> vector<8x16xf32>
    %4 = vector.broadcast %2 : vector<1x16xf32> to vector<8x16xf32>
    %5 = arith.addf %3, %4 : vector<8x16xf32>
    %6 = math.tanh %5 : vector<8x16xf32>
    %c0_5 = arith.constant 0 : index
    %c0_6 = arith.constant 0 : index
    %7 = vector.load %arg4[%c0_5, %c0_6] : memref<16x8xf32, #tpu.memory_space<vmem>>, vector<16x8xf32>
    %c0_7 = arith.constant 0 : index
    %c0_8 = arith.constant 0 : index
    %8 = vector.load %arg5[%c0_7, %c0_8] : memref<1x8xf32, #tpu.memory_space<vmem>>, vector<1x8xf32>
    %cst_9 = arith.constant dense<0.000000e+00> : vector<8x8xf32>
    %9 = tpu.matmul %6, %7, %cst_9 {dimension_numbers = #tpu.dot_dimension_numbers<[1], [0], [0], [1], [0, 0, 1, 1], [], []>} : vector<8x16xf32>, vector<16x8xf32>, vector<8x8xf32> -> vector<8x8xf32>
    %10 = vector.broadcast %8 : vector<1x8xf32> to vector<8x8xf32>
    %11 = arith.addf %9, %10 : vector<8x8xf32>
    %12 = math.tanh %11 : vector<8x8xf32>
    %c0_10 = arith.constant 0 : index
    %c0_11 = arith.constant 0 : index
    %13 = vector.load %arg6[%c0_10, %c0_11] : memref<8x16xf32, #tpu.memory_space<vmem>>, vector<8x16xf32>
    %c0_12 = arith.constant 0 : index
    %c0_13 = arith.constant 0 : index
    %14 = vector.load %arg7[%c0_12, %c0_13] : memref<1x16xf32, #tpu.memory_space<vmem>>, vector<1x16xf32>
    %cst_14 = arith.constant dense<0.000000e+00> : vector<8x16xf32>
    %15 = tpu.matmul %12, %13, %cst_14 {dimension_numbers = #tpu.dot_dimension_numbers<[1], [0], [0], [1], [0, 0, 1, 1], [], []>} : vector<8x8xf32>, vector<8x16xf32>, vector<8x16xf32> -> vector<8x16xf32>
    %16 = vector.broadcast %14 : vector<1x16xf32> to vector<8x16xf32>
    %17 = arith.addf %15, %16 : vector<8x16xf32>
    %18 = math.tanh %17 : vector<8x16xf32>
    %c0_15 = arith.constant 0 : index
    %c0_16 = arith.constant 0 : index
    %19 = vector.load %arg8[%c0_15, %c0_16] : memref<16x32xf32, #tpu.memory_space<vmem>>, vector<16x32xf32>
    %c0_17 = arith.constant 0 : index
    %c0_18 = arith.constant 0 : index
    %20 = vector.load %arg9[%c0_17, %c0_18] : memref<1x32xf32, #tpu.memory_space<vmem>>, vector<1x32xf32>
    %cst_19 = arith.constant dense<0.000000e+00> : vector<8x32xf32>
    %21 = tpu.matmul %18, %19, %cst_19 {dimension_numbers = #tpu.dot_dimension_numbers<[1], [0], [0], [1], [0, 0, 1, 1], [], []>} : vector<8x16xf32>, vector<16x32xf32>, vector<8x32xf32> -> vector<8x32xf32>
    %22 = vector.broadcast %20 : vector<1x32xf32> to vector<8x32xf32>
    %23 = arith.addf %21, %22 : vector<8x32xf32>
    %24 = math.tanh %23 : vector<8x32xf32>
    %c0_20 = arith.constant 0 : index
    %c0_21 = arith.constant 0 : index
    %25 = vector.load %arg10[%c0_20, %c0_21] : memref<8x32xf32, #tpu.memory_space<vmem>>, vector<8x32xf32>
    tpu.vector_store %arg10[%c0_20, %c0_21], %24 {strides = array<i32>} : memref<8x32xf32, #tpu.memory_space<vmem>>, vector<8x32xf32>,
    return
  }
  func.func @transform_0(%arg0: i32) -> (i32, i32) {
    %c0_i32 = arith.constant 0 : i32
    %c0_i32_0 = arith.constant 0 : i32
    return %arg0, %c0_i32 : i32, i32
  }
  func.func @transform_1(%arg0: i32) -> (i32, i32) {
    %c0_i32 = arith.constant 0 : i32
    %c0_i32_0 = arith.constant 0 : i32
    %c0_i32_1 = arith.constant 0 : i32
    return %c0_i32, %c0_i32_0 : i32, i32
  }
  func.func @transform_2(%arg0: i32) -> (i32, i32) {
    %c0_i32 = arith.constant 0 : i32
    %c0_i32_0 = arith.constant 0 : i32
    %c0_i32_1 = arith.constant 0 : i32
    return %c0_i32, %c0_i32_0 : i32, i32
  }
  func.func @transform_3(%arg0: i32) -> (i32, i32) {
    %c0_i32 = arith.constant 0 : i32
    %c0_i32_0 = arith.constant 0 : i32
    %c0_i32_1 = arith.constant 0 : i32
    return %c0_i32, %c0_i32_0 : i32, i32
  }
  func.func @transform_4(%arg0: i32) -> (i32, i32) {
    %c0_i32 = arith.constant 0 : i32
    %c0_i32_0 = arith.constant 0 : i32
    %c0_i32_1 = arith.constant 0 : i32
    return %c0_i32, %c0_i32_0 : i32, i32
  }
  func.func @transform_5(%arg0: i32) -> (i32, i32) {
    %c0_i32 = arith.constant 0 : i32
    %c0_i32_0 = arith.constant 0 : i32
    %c0_i32_1 = arith.constant 0 : i32
    return %c0_i32, %c0_i32_0 : i32, i32
  }
  func.func @transform_6(%arg0: i32) -> (i32, i32) {
    %c0_i32 = arith.constant 0 : i32
    %c0_i32_0 = arith.constant 0 : i32
    %c0_i32_1 = arith.constant 0 : i32
    return %c0_i32, %c0_i32_0 : i32, i32
  }
  func.func @transform_7(%arg0: i32) -> (i32, i32) {
    %c0_i32 = arith.constant 0 : i32
    %c0_i32_0 = arith.constant 0 : i32
    %c0_i32_1 = arith.constant 0 : i32
    return %c0_i32, %c0_i32_0 : i32, i32
  }
  func.func @transform_8(%arg0: i32) -> (i32, i32) {
    %c0_i32 = arith.constant 0 : i32
    %c0_i32_0 = arith.constant 0 : i32
    %c0_i32_1 = arith.constant 0 : i32
    return %c0_i32, %c0_i32_0 : i32, i32
  }
  func.func @transform_9(%arg0: i32) -> (i32, i32) {
    %c0_i32 = arith.constant 0 : i32
    %c0_i32_0 = arith.constant 0 : i32
    return %arg0, %c0_i32 : i32, i32
  }
}

</mosaic_0001>

<llo_original>
// kernel: a_call__.1
$region0: #{a_call__.1}
  #allocation0 [shape = 'u32[]', space=smem, size = 0x4, offset = 0x4, fixed_abs, tag = 'smem constant byte address 0x4 - core index']
  #allocation1 [shape = 'u32[144,128]{1,0:T(1,128)}', space=vmem, size = 0x12000, scoped, tag = 'internal scratch']
  %s0 = inlined_call_operand.hbm [shape: f32[8,32], index: 0, kind: input, shape index: {}]
  %s1 = inlined_call_operand.hbm [shape: f32[32,16], index: 1, kind: input, shape index: {}]
  %s2 = inlined_call_operand.hbm [shape: f32[1,16], index: 2, kind: input, shape index: {}]
  %s3 = inlined_call_operand.hbm [shape: f32[16,8], index: 3, kind: input, shape index: {}]
  %s4 = inlined_call_operand.hbm [shape: f32[1,8], index: 4, kind: input, shape index: {}]
  %s5 = inlined_call_operand.vmem [shape: f32[8,16], index: 5, kind: input, shape index: {}]
  %s6 = inlined_call_operand.vmem [shape: f32[1,16], index: 6, kind: input, shape index: {}]
  %s7 = inlined_call_operand.hbm [shape: f32[16,32], index: 7, kind: input, shape index: {}]
  %s8 = inlined_call_operand.vmem [shape: f32[1,32], index: 8, kind: input, shape index: {}]
  %s9 = inlined_call_operand.hbm [shape: f32[8,32], index: 9, kind: output, shape index: {}]
  %s10 = sld [smem:[#allocation0]]
  $region70: #{a_call__.1} parent=0
    _
  %s12 = ssub.s32 1, %s10
  %s13 = scalar_select 0, %s12, %s10
  $region1: #{a_call__.1} parent=0
    #allocation2 [shape = 'u8[4096]{0}', space=vmem, size = 0x1000, scoped, tag = 'input window, operand 0, single buffered']
    #allocation3 [shape = 's32[1]{0}', space=sflag, size = 0x4, scoped, tag = 'scoped memory for a_call__.1']
    #allocation4 [shape = 's32[1]{0}', space=sflag, size = 0x4, scoped, tag = 'scoped memory for a_call__.1']
    #allocation5 [shape = 'u8[16384]{0}', space=vmem, size = 0x4000, scoped, tag = 'input window, operand 1, single buffered']
    #allocation6 [shape = 's32[1]{0}', space=sflag, size = 0x4, scoped, tag = 'scoped memory for a_call__.1']
    #allocation7 [shape = 'u8[512]{0}', space=vmem, size = 0x400, scoped, tag = 'input window, operand 2, single buffered']
    #allocation8 [shape = 'u8[8192]{0}', space=vmem, size = 0x2000, scoped, tag = 'input window, operand 3, single buffered']
    #allocation9 [shape = 's32[1]{0}', space=sflag, size = 0x4, scoped, tag = 'scoped memory for a_call__.1']
    #allocation10 [shape = 'u8[512]{0}', space=vmem, size = 0x400, scoped, tag = 'input window, operand 4, single buffered']
    #allocation11 [shape = 'u8[8192]{0}', space=vmem, size = 0x2000, scoped, tag = 'input window, operand 7, single buffered']
    #allocation12 [shape = 's32[1]{0}', space=sflag, size = 0x4, scoped, tag = 'scoped memory for a_call__.1']
    #allocation13 [shape = 'u8[4096]{0}', space=vmem, size = 0x1000, scoped, tag = 'output window, operand 0, single buffered']
    %14 = vsyncpa [#allocation3], 0
    %15 = vsyncpa [#allocation6], 0
    %16 = vsyncpa [#allocation9], 0
    %17 = vsyncpa [#allocation12], 0
    %18 = vsyncpa [#allocation4], 0
    // Predicated region
    $region2: #{a_call__.1} parent=1 // pred_check
      _
    $region3: #{a_call__.1} parent=1 // pred_check_branch
      %20 = sbr.rel (0) target = $region5
    $region4: #{a_call__.1} parent=1 // pred_region
      %s22 = ssub.s32 128, 128
      %23 = vsyncadd [#allocation3], %s22
      %s25 = sshll.u32 [#allocation2], 4
      %s26 = int_to_ptr.vmem [resolvable:$true] %s25
      %28 = dma.hbm_to_vmem [thread:$0]  %s0, 128, %s26, [#allocation3]
    $region5: #{a_call__.1} parent=1 // pred_fallthru
      _
    // Predicated region
    $region6: #{a_call__.1} parent=1 // pred_check
      _
    $region7: #{a_call__.1} parent=1 // pred_check_branch
      %30 = sbr.rel (0) target = $region9
    $region8: #{a_call__.1} parent=1 // pred_region
      %s32 = ssub.s32 512, 512
      %33 = vsyncadd [#allocation6], %s32
      %s34 = sshll.u32 [#allocation5], 4
      %s35 = int_to_ptr.vmem [resolvable:$true] %s34
      %40 = dma.hbm_to_vmem [thread:$0]  %s1, 512, %s35, [#allocation6], 128, 128, 8
    $region9: #{a_call__.1} parent=1 // pred_fallthru
      _
    // Predicated region
    $region10: #{a_call__.1} parent=1 // pred_check
      _
    $region11: #{a_call__.1} parent=1 // pred_check_branch
      %42 = sbr.rel (0) target = $region13
    $region12: #{a_call__.1} parent=1 // pred_region
      %s44 = ssub.s32 16, 16
      %45 = vsyncadd [#allocation6], %s44
      %s47 = sshll.u32 [#allocation7], 4
      %s48 = int_to_ptr.vmem [resolvable:$true] %s47
      %50 = dma.hbm_to_vmem [thread:$0]  %s2, 16, %s48, [#allocation6]
    $region13: #{a_call__.1} parent=1 // pred_fallthru
      _
    // Predicated region
    $region14: #{a_call__.1} parent=1 // pred_check
      _
    $region15: #{a_call__.1} parent=1 // pred_check_branch
      %52 = sbr.rel (0) target = $region17
    $region16: #{a_call__.1} parent=1 // pred_region
      %s54 = ssub.s32 256, 256
      %55 = vsyncadd [#allocation9], %s54
      %s56 = sshll.u32 [#allocation8], 4
      %s57 = int_to_ptr.vmem [resolvable:$true] %s56
      %62 = dma.hbm_to_vmem [thread:$0]  %s3, 256, %s57, [#allocation9], 128, 128, 8
    $region17: #{a_call__.1} parent=1 // pred_fallthru
      _
    // Predicated region
    $region18: #{a_call__.1} parent=1 // pred_check
      _
    $region19: #{a_call__.1} parent=1 // pred_check_branch
      %64 = sbr.rel (0) target = $region21
    $region20: #{a_call__.1} parent=1 // pred_region
      %s66 = ssub.s32 16, 16
      %67 = vsyncadd [#allocation9], %s66
      %s69 = sshll.u32 [#allocation10], 4
      %s70 = int_to_ptr.vmem [resolvable:$true] %s69
      %72 = dma.hbm_to_vmem [thread:$0]  %s4, 16, %s70, [#allocation9]
    $region21: #{a_call__.1} parent=1 // pred_fallthru
      _
    // Predicated region
    $region22: #{a_call__.1} parent=1 // pred_check
      _
    $region23: #{a_call__.1} parent=1 // pred_check_branch
      %74 = sbr.rel (0) target = $region25
    $region24: #{a_call__.1} parent=1 // pred_region
      _
    $region25: #{a_call__.1} parent=1 // pred_fallthru
      _
    // Predicated region
    $region26: #{a_call__.1} parent=1 // pred_check
      _
    $region27: #{a_call__.1} parent=1 // pred_check_branch
      %76 = sbr.rel (0) target = $region29
    $region28: #{a_call__.1} parent=1 // pred_region
      _
    $region29: #{a_call__.1} parent=1 // pred_fallthru
      _
    // Predicated region
    $region30: #{a_call__.1} parent=1 // pred_check
      _
    $region31: #{a_call__.1} parent=1 // pred_check_branch
      %78 = sbr.rel (0) target = $region33
    $region32: #{a_call__.1} parent=1 // pred_region
      %s80 = ssub.s32 256, 256
      %81 = vsyncadd [#allocation12], %s80
      %s82 = sshll.u32 [#allocation11], 4
      %s83 = int_to_ptr.vmem [resolvable:$true] %s82
      %88 = dma.hbm_to_vmem [thread:$0]  %s7, 256, %s83, [#allocation12], 128, 128, 8
    $region33: #{a_call__.1} parent=1 // pred_fallthru
      _
    // Predicated region
    $region34: #{a_call__.1} parent=1 // pred_check
      _
    $region35: #{a_call__.1} parent=1 // pred_check_branch
      %90 = sbr.rel (0) target = $region37
    $region36: #{a_call__.1} parent=1 // pred_region
      _
    $region37: #{a_call__.1} parent=1 // pred_fallthru
      _
    // Predicated region
    $region38: #{a_call__.1} parent=1 // pred_check
      _
    $region39: #{a_call__.1} parent=1 // pred_check_branch
      %92 = sbr.rel (0) target = $region41
    $region40: #{a_call__.1} parent=1 // pred_region
      %93 = dma.done [#allocation3], 128
    $region41: #{a_call__.1} parent=1 // pred_fallthru
      _
    // Predicated region
    $region42: #{a_call__.1} parent=1 // pred_check
      _
    $region43: #{a_call__.1} parent=1 // pred_check_branch
      %95 = sbr.rel (0) target = $region45
    $region44: #{a_call__.1} parent=1 // pred_region
      %96 = dma.done [#allocation6], 512
    $region45: #{a_call__.1} parent=1 // pred_fallthru
      _
    // Predicated region
    $region46: #{a_call__.1} parent=1 // pred_check
      _
    $region47: #{a_call__.1} parent=1 // pred_check_branch
      %98 = sbr.rel (0) target = $region49
    $region48: #{a_call__.1} parent=1 // pred_region
      %99 = dma.done [#allocation6], 16
    $region49: #{a_call__.1} parent=1 // pred_fallthru
      _
    // Predicated region
    $region50: #{a_call__.1} parent=1 // pred_check
      _
    $region51: #{a_call__.1} parent=1 // pred_check_branch
      %101 = sbr.rel (0) target = $region53
    $region52: #{a_call__.1} parent=1 // pred_region
      %102 = dma.done [#allocation9], 256
    $region53: #{a_call__.1} parent=1 // pred_fallthru
      _
    // Predicated region
    $region54: #{a_call__.1} parent=1 // pred_check
      _
    $region55: #{a_call__.1} parent=1 // pred_check_branch
      %104 = sbr.rel (0) target = $region57
    $region56: #{a_call__.1} parent=1 // pred_region
      %105 = dma.done [#allocation9], 16
    $region57: #{a_call__.1} parent=1 // pred_fallthru
      _
    // Predicated region
    $region58: #{a_call__.1} parent=1 // pred_check
      _
    $region59: #{a_call__.1} parent=1 // pred_check_branch
      %107 = sbr.rel (0) target = $region61
    $region60: #{a_call__.1} parent=1 // pred_region
      %108 = dma.done [#allocation12], 256
    $region61: #{a_call__.1} parent=1 // pred_fallthru
      _
    %v109 = vld [vmem:[#allocation2] sm:$0xff]
    %v110 = vld [vmem:[#allocation5] sm:$0xff]
    %v111 = vld [vmem:[#allocation5 + $0x8] sm:$0xff]
    %v112 = vld [vmem:[#allocation5 + $0x10] sm:$0xff]
    %v113 = vld [vmem:[#allocation5 + $0x18] sm:$0xff]
    %v114 = vld [vmem:[#allocation7] sm:$0x1]
    %v116 = vlaneseq
    %v117 = vshrl.u32 %v116, 7
    %v118 = vsub.s32 0, %v117
    %v119 = vrot.slane %v114, %v118
    %vm121 = vcmask 261120
    %v123 = vsel %vm121, %v109, 0
    %125 = vmatprep.subr.mxu0 0.0
    %126 = vmatpush1.msra.mxu0 0.0
    %127 = vmatprep.subr.mxu0 0.0
    %128 = vmatpush1.msra.mxu0 0.0
    %129 = vmatprep.subr.mxu0 0.0
    %130 = vmatpush1.msra.mxu0 0.0
    %131 = vmatprep.subr.mxu0 0.0
    %132 = vmatpush1.msra.mxu0 0.0
    %133 = vmatprep.subr.mxu0 0.0
    %134 = vmatpush1.msra.mxu0 0.0
    %135 = vmatprep.subr.mxu0 0.0
    %136 = vmatpush1.msra.mxu0 0.0
    %137 = vmatprep.subr.mxu0 0.0
    %138 = vmatpush1.msra.mxu0 0.0
    %139 = vmatprep.subr.mxu0 0.0
    %140 = vmatpush1.msra.mxu0 0.0
    %141 = vmatprep.subr.mxu0 0.0
    %142 = vmatpush1.msra.mxu0 0.0
    %143 = vmatprep.subr.mxu0 0.0
    %144 = vmatpush1.msra.mxu0 0.0
    %145 = vmatprep.subr.mxu0 0.0
    %146 = vmatpush1.msra.mxu0 0.0
    %147 = vmatprep.subr.mxu0 0.0
    %148 = vmatpush1.msra.mxu0 0.0
    %149 = vmatprep.subr.mxu0 0.0
    %150 = vmatpush1.msra.mxu0 %v113
    %151 = vmatprep.subr.mxu0 0.0
    %152 = vmatpush1.msra.mxu0 %v112
    %153 = vmatprep.subr.mxu0 0.0
    %154 = vmatpush1.msra.mxu0 %v111
    %155 = vmatprep.subr.mxu0 0.0
    %156 = vmatpush1.msra.mxu0 %v110
    %157 = vmatprep.subr.mxu0 0.0
    %158 = vmatpush2.msra.mxu0 0.0
    %159 = vmatprep.subr.mxu0 0.0
    %160 = vmatpush2.msra.mxu0 0.0
    %161 = vmatprep.subr.mxu0 0.0
    %162 = vmatpush2.msra.mxu0 0.0
    %163 = vmatprep.subr.mxu0 0.0
    %164 = vmatpush2.msra.mxu0 0.0
    %165 = vmatprep.subr.mxu0 0.0
    %166 = vmatpush2.msra.mxu0 0.0
    %167 = vmatprep.subr.mxu0 0.0
    %168 = vmatpush2.msra.mxu0 0.0
    %169 = vmatprep.subr.mxu0 0.0
    %170 = vmatpush2.msra.mxu0 0.0
    %171 = vmatprep.subr.mxu0 0.0
    %172 = vmatpush2.msra.mxu0 0.0
    %173 = vmatprep.subr.mxu0 0.0
    %174 = vmatpush2.msra.mxu0 0.0
    %175 = vmatprep.subr.mxu0 0.0
    %176 = vmatpush2.msra.mxu0 0.0
    %177 = vmatprep.subr.mxu0 0.0
    %178 = vmatpush2.msra.mxu0 0.0
    %179 = vmatprep.subr.mxu0 0.0
    %180 = vmatpush2.msra.mxu0 0.0
    %181 = vmatprep.subr.mxu0 0.0
    %182 = vmatpush2.msra.mxu0 0.0
    %183 = vmatprep.subr.mxu0 0.0
    %184 = vmatpush2.msra.mxu0 0.0
    %185 = vmatprep.subr.mxu0 0.0
    %186 = vmatpush2.msra.mxu0 0.0
    %187 = vmatprep.subr.mxu0 0.0
    %188 = vmatpush2.msra.mxu0 0.0
    %189 = vmatprep.mubr.f32.mxu0 0.0
    %190 = vmatmul.mubr.f32.gmra.mxu0 %v123
    %v191 = vpop.f32.mrf.mxu0
    %v192 = vadd.f32 %v119, %v191
    %v193 = vpop.f32.mrf.mxu0
    %194 = vdwg.mxu0
    %v195 = vtanh.pop %v192
    %v196 = vld [vmem:[#allocation8] sm:$0xff]
    %v197 = vld [vmem:[#allocation8 + $0x8] sm:$0xff]
    %v198 = vld [vmem:[#allocation10] sm:$0x1]
    %v200 = vlaneseq
    %v201 = vshrl.u32 %v200, 7
    %v202 = vsub.s32 0, %v201
    %v203 = vrot.slane %v198, %v202
    %vm205 = vcmask 130048
    %v207 = vsel %vm205, %v195, 0
    %209 = vmatprep.subr.mxu0 0.0
    %210 = vmatpush1.msra.mxu0 0.0
    %211 = vmatprep.subr.mxu0 0.0
    %212 = vmatpush1.msra.mxu0 0.0
    %213 = vmatprep.subr.mxu0 0.0
    %214 = vmatpush1.msra.mxu0 0.0
    %215 = vmatprep.subr.mxu0 0.0
    %216 = vmatpush1.msra.mxu0 0.0
    %217 = vmatprep.subr.mxu0 0.0
    %218 = vmatpush1.msra.mxu0 0.0
    %219 = vmatprep.subr.mxu0 0.0
    %220 = vmatpush1.msra.mxu0 0.0
    %221 = vmatprep.subr.mxu0 0.0
    %222 = vmatpush1.msra.mxu0 0.0
    %223 = vmatprep.subr.mxu0 0.0
    %224 = vmatpush1.msra.mxu0 0.0
    %225 = vmatprep.subr.mxu0 0.0
    %226 = vmatpush1.msra.mxu0 0.0
    %227 = vmatprep.subr.mxu0 0.0
    %228 = vmatpush1.msra.mxu0 0.0
    %229 = vmatprep.subr.mxu0 0.0
    %230 = vmatpush1.msra.mxu0 0.0
    %231 = vmatprep.subr.mxu0 0.0
    %232 = vmatpush1.msra.mxu0 0.0
    %233 = vmatprep.subr.mxu0 0.0
    %234 = vmatpush1.msra.mxu0 0.0
    %235 = vmatprep.subr.mxu0 0.0
    %236 = vmatpush1.msra.mxu0 0.0
    %237 = vmatprep.subr.mxu0 0.0
    %238 = vmatpush1.msra.mxu0 %v197
    %239 = vmatprep.subr.mxu0 0.0
    %240 = vmatpush1.msra.mxu0 %v196
    %241 = vmatprep.subr.mxu0 0.0
    %242 = vmatpush2.msra.mxu0 0.0
    %243 = vmatprep.subr.mxu0 0.0
    %244 = vmatpush2.msra.mxu0 0.0
    %245 = vmatprep.subr.mxu0 0.0
    %246 = vmatpush2.msra.mxu0 0.0
    %247 = vmatprep.subr.mxu0 0.0
    %248 = vmatpush2.msra.mxu0 0.0
    %249 = vmatprep.subr.mxu0 0.0
    %250 = vmatpush2.msra.mxu0 0.0
    %251 = vmatprep.subr.mxu0 0.0
    %252 = vmatpush2.msra.mxu0 0.0
    %253 = vmatprep.subr.mxu0 0.0
    %254 = vmatpush2.msra.mxu0 0.0
    %255 = vmatprep.subr.mxu0 0.0
    %256 = vmatpush2.msra.mxu0 0.0
    %257 = vmatprep.subr.mxu0 0.0
    %258 = vmatpush2.msra.mxu0 0.0
    %259 = vmatprep.subr.mxu0 0.0
    %260 = vmatpush2.msra.mxu0 0.0
    %261 = vmatprep.subr.mxu0 0.0
    %262 = vmatpush2.msra.mxu0 0.0
    %263 = vmatprep.subr.mxu0 0.0
    %264 = vmatpush2.msra.mxu0 0.0
    %265 = vmatprep.subr.mxu0 0.0
    %266 = vmatpush2.msra.mxu0 0.0
    %267 = vmatprep.subr.mxu0 0.0
    %268 = vmatpush2.msra.mxu0 0.0
    %269 = vmatprep.subr.mxu0 0.0
    %270 = vmatpush2.msra.mxu0 0.0
    %271 = vmatprep.subr.mxu0 0.0
    %272 = vmatpush2.msra.mxu0 0.0
    %273 = vmatprep.mubr.f32.mxu0 0.0
    %274 = vmatmul.mubr.f32.gmra.mxu0 %v207
    %v275 = vpop.f32.mrf.mxu0
    %v276 = vadd.f32 %v203, %v275
    %v277 = vpop.f32.mrf.mxu0
    %278 = vdwg.mxu0
    %v279 = vtanh.pop %v276
    %v280 = vld [vmem:[%s5] sm:$0xff]
    %v281 = vld [vmem:[%s6] sm:$0x1]
    %v283 = vlaneseq
    %v284 = vshrl.u32 %v283, 7
    %v285 = vsub.s32 0, %v284
    %v286 = vrot.slane %v281, %v285
    %vm288 = vcmask 64512
    %v290 = vsel %vm288, %v279, 0
    %292 = vmatprep.subr.mxu0 0.0
    %293 = vmatpush1.msra.mxu0 0.0
    %294 = vmatprep.subr.mxu0 0.0
    %295 = vmatpush1.msra.mxu0 0.0
    %296 = vmatprep.subr.mxu0 0.0
    %297 = vmatpush1.msra.mxu0 0.0
    %298 = vmatprep.subr.mxu0 0.0
    %299 = vmatpush1.msra.mxu0 0.0
    %300 = vmatprep.subr.mxu0 0.0
    %301 = vmatpush1.msra.mxu0 0.0
    %302 = vmatprep.subr.mxu0 0.0
    %303 = vmatpush1.msra.mxu0 0.0
    %304 = vmatprep.subr.mxu0 0.0
    %305 = vmatpush1.msra.mxu0 0.0
    %306 = vmatprep.subr.mxu0 0.0
    %307 = vmatpush1.msra.mxu0 0.0
    %308 = vmatprep.subr.mxu0 0.0
    %309 = vmatpush1.msra.mxu0 0.0
    %310 = vmatprep.subr.mxu0 0.0
    %311 = vmatpush1.msra.mxu0 0.0
    %312 = vmatprep.subr.mxu0 0.0
    %313 = vmatpush1.msra.mxu0 0.0
    %314 = vmatprep.subr.mxu0 0.0
    %315 = vmatpush1.msra.mxu0 0.0
    %316 = vmatprep.subr.mxu0 0.0
    %317 = vmatpush1.msra.mxu0 0.0
    %318 = vmatprep.subr.mxu0 0.0
    %319 = vmatpush1.msra.mxu0 0.0
    %320 = vmatprep.subr.mxu0 0.0
    %321 = vmatpush1.msra.mxu0 0.0
    %322 = vmatprep.subr.mxu0 0.0
    %323 = vmatpush1.msra.mxu0 %v280
    %324 = vmatprep.subr.mxu0 0.0
    %325 = vmatpush2.msra.mxu0 0.0
    %326 = vmatprep.subr.mxu0 0.0
    %327 = vmatpush2.msra.mxu0 0.0
    %328 = vmatprep.subr.mxu0 0.0
    %329 = vmatpush2.msra.mxu0 0.0
    %330 = vmatprep.subr.mxu0 0.0
    %331 = vmatpush2.msra.mxu0 0.0
    %332 = vmatprep.subr.mxu0 0.0
    %333 = vmatpush2.msra.mxu0 0.0
    %334 = vmatprep.subr.mxu0 0.0
    %335 = vmatpush2.msra.mxu0 0.0
    %336 = vmatprep.subr.mxu0 0.0
    %337 = vmatpush2.msra.mxu0 0.0
    %338 = vmatprep.subr.mxu0 0.0
    %339 = vmatpush2.msra.mxu0 0.0
    %340 = vmatprep.subr.mxu0 0.0
    %341 = vmatpush2.msra.mxu0 0.0
    %342 = vmatprep.subr.mxu0 0.0
    %343 = vmatpush2.msra.mxu0 0.0
    %344 = vmatprep.subr.mxu0 0.0
    %345 = vmatpush2.msra.mxu0 0.0
    %346 = vmatprep.subr.mxu0 0.0
    %347 = vmatpush2.msra.mxu0 0.0
    %348 = vmatprep.subr.mxu0 0.0
    %349 = vmatpush2.msra.mxu0 0.0
    %350 = vmatprep.subr.mxu0 0.0
    %351 = vmatpush2.msra.mxu0 0.0
    %352 = vmatprep.subr.mxu0 0.0
    %353 = vmatpush2.msra.mxu0 0.0
    %354 = vmatprep.subr.mxu0 0.0
    %355 = vmatpush2.msra.mxu0 0.0
    %356 = vmatprep.mubr.f32.mxu0 0.0
    %357 = vmatmul.mubr.f32.gmra.mxu0 %v290
    %v358 = vpop.f32.mrf.mxu0
    %v359 = vadd.f32 %v286, %v358
    %v360 = vpop.f32.mrf.mxu0
    %361 = vdwg.mxu0
    %v362 = vtanh.pop %v359
    %v363 = vld [vmem:[#allocation11] sm:$0xff]
    %v364 = vld [vmem:[#allocation11 + $0x8] sm:$0xff]
    %v365 = vld [vmem:[%s8] sm:$0x1]
    %v367 = vlaneseq
    %v368 = vshrl.u32 %v367, 7
    %v369 = vsub.s32 0, %v368
    %v370 = vrot.slane %v365, %v369
    %v373 = vsel %vm205, %v362, 0
    %375 = vmatprep.subr.mxu0 0.0
    %376 = vmatpush1.msra.mxu0 0.0
    %377 = vmatprep.subr.mxu0 0.0
    %378 = vmatpush1.msra.mxu0 0.0
    %379 = vmatprep.subr.mxu0 0.0
    %380 = vmatpush1.msra.mxu0 0.0
    %381 = vmatprep.subr.mxu0 0.0
    %382 = vmatpush1.msra.mxu0 0.0
    %383 = vmatprep.subr.mxu0 0.0
    %384 = vmatpush1.msra.mxu0 0.0
    %385 = vmatprep.subr.mxu0 0.0
    %386 = vmatpush1.msra.mxu0 0.0
    %387 = vmatprep.subr.mxu0 0.0
    %388 = vmatpush1.msra.mxu0 0.0
    %389 = vmatprep.subr.mxu0 0.0
    %390 = vmatpush1.msra.mxu0 0.0
    %391 = vmatprep.subr.mxu0 0.0
    %392 = vmatpush1.msra.mxu0 0.0
    %393 = vmatprep.subr.mxu0 0.0
    %394 = vmatpush1.msra.mxu0 0.0
    %395 = vmatprep.subr.mxu0 0.0
    %396 = vmatpush1.msra.mxu0 0.0
    %397 = vmatprep.subr.mxu0 0.0
    %398 = vmatpush1.msra.mxu0 0.0
    %399 = vmatprep.subr.mxu0 0.0
    %400 = vmatpush1.msra.mxu0 0.0
    %401 = vmatprep.subr.mxu0 0.0
    %402 = vmatpush1.msra.mxu0 0.0
    %403 = vmatprep.subr.mxu0 0.0
    %404 = vmatpush1.msra.mxu0 %v364
    %405 = vmatprep.subr.mxu0 0.0
    %406 = vmatpush1.msra.mxu0 %v363
    %407 = vmatprep.subr.mxu0 0.0
    %408 = vmatpush2.msra.mxu0 0.0
    %409 = vmatprep.subr.mxu0 0.0
    %410 = vmatpush2.msra.mxu0 0.0
    %411 = vmatprep.subr.mxu0 0.0
    %412 = vmatpush2.msra.mxu0 0.0
    %413 = vmatprep.subr.mxu0 0.0
    %414 = vmatpush2.msra.mxu0 0.0
    %415 = vmatprep.subr.mxu0 0.0
    %416 = vmatpush2.msra.mxu0 0.0
    %417 = vmatprep.subr.mxu0 0.0
    %418 = vmatpush2.msra.mxu0 0.0
    %419 = vmatprep.subr.mxu0 0.0
    %420 = vmatpush2.msra.mxu0 0.0
    %421 = vmatprep.subr.mxu0 0.0
    %422 = vmatpush2.msra.mxu0 0.0
    %423 = vmatprep.subr.mxu0 0.0
    %424 = vmatpush2.msra.mxu0 0.0
    %425 = vmatprep.subr.mxu0 0.0
    %426 = vmatpush2.msra.mxu0 0.0
    %427 = vmatprep.subr.mxu0 0.0
    %428 = vmatpush2.msra.mxu0 0.0
    %429 = vmatprep.subr.mxu0 0.0
    %430 = vmatpush2.msra.mxu0 0.0
    %431 = vmatprep.subr.mxu0 0.0
    %432 = vmatpush2.msra.mxu0 0.0
    %433 = vmatprep.subr.mxu0 0.0
    %434 = vmatpush2.msra.mxu0 0.0
    %435 = vmatprep.subr.mxu0 0.0
    %436 = vmatpush2.msra.mxu0 0.0
    %437 = vmatprep.subr.mxu0 0.0
    %438 = vmatpush2.msra.mxu0 0.0
    %439 = vmatprep.mubr.f32.mxu0 0.0
    %440 = vmatmul.mubr.f32.gmra.mxu0 %v373
    %v441 = vpop.f32.mrf.mxu0
    %v442 = vadd.f32 %v370, %v441
    %v443 = vpop.f32.mrf.mxu0
    %444 = vdwg.mxu0
    %v445 = vtanh.pop %v442
    %446 = vst.msk [vmem:[#allocation13] sm:$0xff] %vm121, %v445
    // Predicated region
    $region62: #{a_call__.1} parent=1 // pred_check
      _
    $region63: #{a_call__.1} parent=1 // pred_check_branch
      %448 = sbr.rel (0) target = $region65
    $region64: #{a_call__.1} parent=1 // pred_region
      %s450 = ssub.s32 128, 128
      %451 = vsyncadd [#allocation4], %s450
      %s453 = sshll.u32 [#allocation13], 4
      %s454 = int_to_ptr.vmem [resolvable:$true] %s453
      %456 = dma.vmem_to_hbm [thread:$0]  %s454, 128, %s9, [#allocation4]
    $region65: #{a_call__.1} parent=1 // pred_fallthru
      _
    // Predicated region
    $region66: #{a_call__.1} parent=1 // pred_check
      _
    $region67: #{a_call__.1} parent=1 // pred_check_branch
      %458 = sbr.rel (0) target = $region69
    $region68: #{a_call__.1} parent=1 // pred_region
      %459 = dma.done [#allocation4], 128
    $region69: #{a_call__.1} parent=1 // pred_fallthru
      _
    %460 = vsyncpa [#allocation3], 1
    %461 = vsyncpa [#allocation6], 1
    %462 = vsyncpa [#allocation9], 1
    %463 = vsyncpa [#allocation12], 1
    %464 = vsyncpa [#allocation4], 1

</llo_original>
